<compile_context>
chip_gen: v6e
topology: v6e:2x2x1
jax: 0.10.0
libtpu: 0.0.40
codegen_flags: <defaults>
</compile_context>

<pallas_src>
import jax
import jax.numpy as jnp
from jax.experimental import pallas as pl
from jax.experimental.pallas import tpu as pltpu


def _maxpoolpad_kernel(x_ref, o_ref):
    """x_ref: (H, W, tr, L)  ->  o_ref: (H//2, W//2, tr, L)."""
    x = x_ref[...]
    H, W, tr, L = x.shape
    Ho, Wo = H // 2, W // 2

    # ---- rows: out row i = max over input rows {2i, 2i+1, min(2i+2, H-2)} ----
    # Leading-dim reshape/slice only.  The clamp duplicates row H-2 for the last
    # output row, which is a no-op under max -> matches the clipped window.
    xr = x.reshape(Ho, 2, W, tr, L)
    r_even = xr[:, 0]                                   # rows 0, 2, ..., H-2
    r_odd = xr[:, 1]                                    # rows 1, 3, ..., H-1
    rowmax = jnp.maximum(r_even, r_odd)
    if Ho > 1:
        r_next = jnp.concatenate([r_even[1:], r_even[Ho - 1:]], axis=0)
        rowmax = jnp.maximum(rowmax, r_next)            # (Ho, W, tr, L)

    # ---- cols: same trick along W (also a leading dim in this layout) ----
    rc = rowmax.reshape(Ho, Wo, 2, tr, L)
    c_even = rc[:, :, 0]                                # cols 0, 2, ..., W-2
    c_odd = rc[:, :, 1]                                 # cols 1, 3, ..., W-1
    out = jnp.maximum(c_even, c_odd)
    if Wo > 1:
        c_next = jnp.concatenate([c_even[:, 1:], c_even[:, Wo - 1:]], axis=1)
        out = jnp.maximum(out, c_next)                  # (Ho, Wo, tr, L)

    o_ref[...] = out.astype(o_ref.dtype)


def _split_lanes(m):
    """Split the flattened N*C axis into (R rows, L lanes), with L as close to
    the 128-lane vreg width as possible so vector stores are dense/unmasked."""
    if m % 128 == 0:
        return m // 128, 128
    l = 1
    for cand in range(min(m, 128), 0, -1):
        if m % cand == 0:
            l = cand
            break
    if l < 8:                      # pathological (e.g. prime M): one lane row
        return 1, m
    return m // l, l


def _pick_row_tile(r, bytes_per_r, max_block_bytes):
    """Largest divisor tr of r that keeps the input block under the byte budget
    and satisfies the Mosaic second-minor block rule (tr % 8 == 0 or tr == r).
    Falls back to the smallest legal tile if nothing fits the budget."""
    legal = [t for t in range(1, r + 1) if r % t == 0 and (t % 8 == 0 or t == r)]
    fitting = [t for t in legal if t * bytes_per_r <= max_block_bytes]
    return max(fitting) if fitting else min(legal)


def maxpoolpad(x_hwm, *, max_block_bytes=2 * 1024 * 1024):
    """MaxPoolPad on a spatial-leading activation.

    Args:
      x_hwm: (H, W, M) array with M = N*C flattened onto the lane axis;
             H and W must be even.
    Returns:
      (H//2, W//2, M) array, same dtype as the input.
    """
    H, W, M = x_hwm.shape
    assert H % 2 == 0 and W % 2 == 0, "kernel assumes even spatial dims"
    Ho, Wo = H // 2, W // 2

    R, L = _split_lanes(M)
    x4 = x_hwm.reshape(H, W, R, L)                     # free, contiguous reshape
    itemsize = jnp.dtype(x_hwm.dtype).itemsize
    tr = _pick_row_tile(R, H * W * L * itemsize, max_block_bytes)
    grid = (R // tr,)

    out4 = pl.pallas_call(
        _maxpoolpad_kernel,
        out_shape=jax.ShapeDtypeStruct((Ho, Wo, R, L), x_hwm.dtype),
        grid=grid,
        in_specs=[pl.BlockSpec((H, W, tr, L), lambda r: (0, 0, r, 0))],
        out_specs=pl.BlockSpec((Ho, Wo, tr, L), lambda r: (0, 0, r, 0)),
        compiler_params=pltpu.CompilerParams(
            dimension_semantics=("parallel",),          # megacore sharding on v7x
            vmem_limit_bytes=32 * 1024 * 1024,
        ),
        cost_estimate=pl.CostEstimate(
            flops=8 * Ho * Wo * M,                      # ~8 compares per output
            transcendentals=0,
            bytes_accessed=(H * W + Ho * Wo) * M * itemsize,
        ),
    )(x4)
    return out4.reshape(Ho, Wo, M)


# ----------------------------- test-only glue -------------------------------

def _nchw_to_hwm(x_nchw):
    """One-time layout change NCHW -> (H, W, N*C). Test glue: a JAX NASNet port
    would keep activations in the spatial-leading layout between cells."""
    n, c, h, w = x_nchw.shape
    return jnp.transpose(x_nchw, (2, 3, 0, 1)).reshape(h, w, n * c)


def _reference_maxpoolpad_nchw(x):
    """Pure-JAX replica of the PyTorch MaxPoolPad module (for validation)."""
    xpad = jnp.pad(x, ((0, 0), (0, 0), (1, 0), (1, 0)))        # ZeroPad2d((1,0,1,0))
    y = jax.lax.reduce_window(
        xpad, -jnp.inf, jax.lax.max,
        window_dimensions=(1, 1, 3, 3),
        window_strides=(1, 1, 2, 2),
        padding=((0, 0), (0, 0), (1, 1), (1, 1)))
    return y[:, :, 1:, 1:]


if __name__ == "__main__":
    key = jax.random.PRNGKey(0)
    k1, k2, k3 = jax.random.split(key, 3)

    # Case 1: module-spec toy shape (N, C, H, W) = (2, 4, 16, 16).
    x1 = jax.random.normal(k1, (2, 4, 16, 16), dtype=jnp.float32)
    out1 = jax.block_until_ready(maxpoolpad(_nchw_to_hwm(x1)))
    ref1 = _nchw_to_hwm(_reference_maxpoolpad_nchw(x1))
    assert out1.shape == (8, 8, 8), out1.shape
    assert jnp.allclose(out1, ref1), "case 1 mismatch vs reference"

    # Case 2: lane-dense, multi-step grid path: M = 4096 -> (R, L) = (32, 128);
    # a 1 MiB block cap gives tr = 8 -> grid = (4,), double-buffered & parallel.
    x2 = jax.random.normal(k2, (2, 2048, 16, 16), dtype=jnp.float32)
    out2 = jax.block_until_ready(
        maxpoolpad(_nchw_to_hwm(x2), max_block_bytes=1 << 20))
    ref2 = _nchw_to_hwm(_reference_maxpoolpad_nchw(x2))
    assert out2.shape == (8, 8, 4096), out2.shape
    assert jnp.allclose(out2, ref2), "case 2 mismatch vs reference"

    # Case 3: bf16 stays bf16 end-to-end (halves HBM traffic / VMEM footprint).
    x3 = jax.random.normal(k3, (2, 1024, 16, 16), dtype=jnp.float32
                           ).astype(jnp.bfloat16)
    out3 = jax.block_until_ready(
        maxpoolpad(_nchw_to_hwm(x3), max_block_bytes=512 * 1024))
    ref3 = _nchw_to_hwm(
        _reference_maxpoolpad_nchw(x3.astype(jnp.float32)).astype(jnp.bfloat16))
    assert out3.dtype == jnp.bfloat16
    assert out3.shape == (8, 8, 2048), out3.shape
    assert jnp.allclose(out3.astype(jnp.float32), ref3.astype(jnp.float32)), \
        "case 3 mismatch vs reference"

    print("KERNEL_OK")
</pallas_src>

<mosaic_0001>
module attributes {stable_mosaic.version = 11 : i64} {
  func.func @_maxpoolpad_kernel(%arg0: i32, %arg1: memref<16x16x1x8xf32, #tpu.memory_space<vmem>>, %arg2: memref<8x8x1x8xf32, #tpu.memory_space<vmem>>) attributes {dimension_semantics = [#tpu.dimension_semantics<parallel>], iteration_bounds = array<i64: 1>, scalar_prefetch = 0 : i64, scratch_operands = 0 : i64, tpu.core_type = #tpu.core_type<tc>, window_params = [{transform_indices = @transform_0, window_bounds = array<i64: 16, 16, 1, 8>}, {transform_indices = @transform_1, window_bounds = array<i64: 8, 8, 1, 8>}]} {
    %c0 = arith.constant 0 : index
    %c0_0 = arith.constant 0 : index
    %c0_1 = arith.constant 0 : index
    %c0_2 = arith.constant 0 : index
    %0 = vector.load %arg1[%c0, %c0_0, %c0_1, %c0_2] : memref<16x16x1x8xf32, #tpu.memory_space<vmem>>, vector<16x16x1x8xf32>
    %1 = vector.shape_cast %0 : vector<16x16x1x8xf32> to vector<8x2x16x1x8xf32>
    %2 = vector.extract_strided_slice %1 {offsets = [0, 0, 0, 0, 0], sizes = [8, 1, 16, 1, 8], strides = [1, 1, 1, 1, 1]} : vector<8x2x16x1x8xf32> to vector<8x1x16x1x8xf32>
    %3 = vector.shape_cast %2 : vector<8x1x16x1x8xf32> to vector<8x16x1x8xf32>
    %4 = vector.extract_strided_slice %1 {offsets = [0, 1, 0, 0, 0], sizes = [8, 1, 16, 1, 8], strides = [1, 1, 1, 1, 1]} : vector<8x2x16x1x8xf32> to vector<8x1x16x1x8xf32>
    %5 = vector.shape_cast %4 : vector<8x1x16x1x8xf32> to vector<8x16x1x8xf32>
    %6 = arith.maximumf %3, %5 : vector<8x16x1x8xf32>
    %7 = vector.extract_strided_slice %3 {offsets = [1, 0, 0, 0], sizes = [7, 16, 1, 8], strides = [1, 1, 1, 1]} : vector<8x16x1x8xf32> to vector<7x16x1x8xf32>
    %8 = vector.extract_strided_slice %3 {offsets = [7, 0, 0, 0], sizes = [1, 16, 1, 8], strides = [1, 1, 1, 1]} : vector<8x16x1x8xf32> to vector<1x16x1x8xf32>
    %9 = tpu.concatenate %7, %8 in 0 : vector<7x16x1x8xf32>, vector<1x16x1x8xf32> -> vector<8x16x1x8xf32>
    %10 = arith.maximumf %6, %9 : vector<8x16x1x8xf32>
    %11 = vector.shape_cast %10 : vector<8x16x1x8xf32> to vector<8x8x2x1x8xf32>
    %12 = vector.extract_strided_slice %11 {offsets = [0, 0, 0, 0, 0], sizes = [8, 8, 1, 1, 8], strides = [1, 1, 1, 1, 1]} : vector<8x8x2x1x8xf32> to vector<8x8x1x1x8xf32>
    %13 = vector.shape_cast %12 : vector<8x8x1x1x8xf32> to vector<8x8x1x8xf32>
    %14 = vector.extract_strided_slice %11 {offsets = [0, 0, 1, 0, 0], sizes = [8, 8, 1, 1, 8], strides = [1, 1, 1, 1, 1]} : vector<8x8x2x1x8xf32> to vector<8x8x1x1x8xf32>
    %15 = vector.shape_cast %14 : vector<8x8x1x1x8xf32> to vector<8x8x1x8xf32>
    %16 = arith.maximumf %13, %15 : vector<8x8x1x8xf32>
    %17 = vector.extract_strided_slice %13 {offsets = [0, 1, 0, 0], sizes = [8, 7, 1, 8], strides = [1, 1, 1, 1]} : vector<8x8x1x8xf32> to vector<8x7x1x8xf32>
    %18 = vector.extract_strided_slice %13 {offsets = [0, 7, 0, 0], sizes = [8, 1, 1, 8], strides = [1, 1, 1, 1]} : vector<8x8x1x8xf32> to vector<8x1x1x8xf32>
    %19 = tpu.concatenate %17, %18 in 1 : vector<8x7x1x8xf32>, vector<8x1x1x8xf32> -> vector<8x8x1x8xf32>
    %20 = arith.maximumf %16, %19 : vector<8x8x1x8xf32>
    %c0_3 = arith.constant 0 : index
    %c0_4 = arith.constant 0 : index
    %c0_5 = arith.constant 0 : index
    %c0_6 = arith.constant 0 : index
    %21 = vector.load %arg2[%c0_3, %c0_4, %c0_5, %c0_6] : memref<8x8x1x8xf32, #tpu.memory_space<vmem>>, vector<8x8x1x8xf32>
    tpu.vector_store %arg2[%c0_3, %c0_4, %c0_5, %c0_6], %20 {strides = array<i32>} : memref<8x8x1x8xf32, #tpu.memory_space<vmem>>, vector<8x8x1x8xf32>,
    return
  }
  func.func @transform_0(%arg0: i32) -> (i32, i32, i32, i32) {
    %c0_i32 = arith.constant 0 : i32
    %c0_i32_0 = arith.constant 0 : i32
    %c0_i32_1 = arith.constant 0 : i32
    %c0_i32_2 = arith.constant 0 : i32
    return %c0_i32, %c0_i32_0, %arg0, %c0_i32_1 : i32, i32, i32, i32
  }
  func.func @transform_1(%arg0: i32) -> (i32, i32, i32, i32) {
    %c0_i32 = arith.constant 0 : i32
    %c0_i32_0 = arith.constant 0 : i32
    %c0_i32_1 = arith.constant 0 : i32
    %c0_i32_2 = arith.constant 0 : i32
    return %c0_i32, %c0_i32_0, %arg0, %c0_i32_1 : i32, i32, i32, i32
  }
}

</mosaic_0001>

<llo_original>
// kernel: tpu_custom_call.1
$region0: #{tpu_custom_call.1}
  #allocation0 [shape = 'u32[]', space=smem, size = 0x4, offset = 0x4, fixed_abs, tag = 'smem constant byte address 0x4 - core index']
  #allocation1 [shape = 'u32[144,128]{1,0:T(1,128)}', space=vmem, size = 0x12000, scoped, tag = 'internal scratch']
  %s0 = inlined_call_operand.vmem [shape: f32[16,16,1,8], index: 0, kind: input, shape index: {}]
  %s1 = inlined_call_operand.hbm [shape: f32[8,8,1,8], index: 1, kind: output, shape index: {}]
  %s2 = sld [smem:[#allocation0]]
  $region14: #{tpu_custom_call.1} parent=0
    _
  %s4 = ssub.s32 1, %s2
  %s5 = scalar_select 0, %s4, %s2
  $region1: #{tpu_custom_call.1} parent=0
    #allocation2 [shape = 'u8[32768]{0}', space=vmem, size = 0x8000, scoped, tag = 'output window, operand 0, single buffered']
    #allocation3 [shape = 's32[1]{0}', space=sflag, size = 0x4, scoped, tag = 'scoped memory for tpu_custom_call.1']
    %6 = vsyncpa [#allocation3], 0
    // Predicated region
    $region2: #{tpu_custom_call.1} parent=1 // pred_check
      _
    $region3: #{tpu_custom_call.1} parent=1 // pred_check_branch
      %8 = sbr.rel (0) target = $region5
    $region4: #{tpu_custom_call.1} parent=1 // pred_region
      _
    $region5: #{tpu_custom_call.1} parent=1 // pred_fallthru
      _
    %v9 = vld [vmem:[%s0] sm:$0x1]
    %v10 = vld [vmem:[%s0 + $0x1] sm:$0x1]
    %v11 = vld [vmem:[%s0 + $0x2] sm:$0x1]
    %v12 = vld [vmem:[%s0 + $0x3] sm:$0x1]
    %v13 = vld [vmem:[%s0 + $0x4] sm:$0x1]
    %v14 = vld [vmem:[%s0 + $0x5] sm:$0x1]
    %v15 = vld [vmem:[%s0 + $0x6] sm:$0x1]
    %v16 = vld [vmem:[%s0 + $0x7] sm:$0x1]
    %v17 = vld [vmem:[%s0 + $0x8] sm:$0x1]
    %v18 = vld [vmem:[%s0 + $0x9] sm:$0x1]
    %v19 = vld [vmem:[%s0 + $0xa] sm:$0x1]
    %v20 = vld [vmem:[%s0 + $0xb] sm:$0x1]
    %v21 = vld [vmem:[%s0 + $0xc] sm:$0x1]
    %v22 = vld [vmem:[%s0 + $0xd] sm:$0x1]
    %v23 = vld [vmem:[%s0 + $0xe] sm:$0x1]
    %v24 = vld [vmem:[%s0 + $0xf] sm:$0x1]
    %v25 = vld [vmem:[%s0 + $0x10] sm:$0x1]
    %v26 = vld [vmem:[%s0 + $0x11] sm:$0x1]
    %v27 = vld [vmem:[%s0 + $0x12] sm:$0x1]
    %v28 = vld [vmem:[%s0 + $0x13] sm:$0x1]
    %v29 = vld [vmem:[%s0 + $0x14] sm:$0x1]
    %v30 = vld [vmem:[%s0 + $0x15] sm:$0x1]
    %v31 = vld [vmem:[%s0 + $0x16] sm:$0x1]
    %v32 = vld [vmem:[%s0 + $0x17] sm:$0x1]
    %v33 = vld [vmem:[%s0 + $0x18] sm:$0x1]
    %v34 = vld [vmem:[%s0 + $0x19] sm:$0x1]
    %v35 = vld [vmem:[%s0 + $0x1a] sm:$0x1]
    %v36 = vld [vmem:[%s0 + $0x1b] sm:$0x1]
    %v37 = vld [vmem:[%s0 + $0x1c] sm:$0x1]
    %v38 = vld [vmem:[%s0 + $0x1d] sm:$0x1]
    %v39 = vld [vmem:[%s0 + $0x1e] sm:$0x1]
    %v40 = vld [vmem:[%s0 + $0x1f] sm:$0x1]
    %v41 = vld [vmem:[%s0 + $0x20] sm:$0x1]
    %v42 = vld [vmem:[%s0 + $0x21] sm:$0x1]
    %v43 = vld [vmem:[%s0 + $0x22] sm:$0x1]
    %v44 = vld [vmem:[%s0 + $0x23] sm:$0x1]
    %v45 = vld [vmem:[%s0 + $0x24] sm:$0x1]
    %v46 = vld [vmem:[%s0 + $0x25] sm:$0x1]
    %v47 = vld [vmem:[%s0 + $0x26] sm:$0x1]
    %v48 = vld [vmem:[%s0 + $0x27] sm:$0x1]
    %v49 = vld [vmem:[%s0 + $0x28] sm:$0x1]
    %v50 = vld [vmem:[%s0 + $0x29] sm:$0x1]
    %v51 = vld [vmem:[%s0 + $0x2a] sm:$0x1]
    %v52 = vld [vmem:[%s0 + $0x2b] sm:$0x1]
    %v53 = vld [vmem:[%s0 + $0x2c] sm:$0x1]
    %v54 = vld [vmem:[%s0 + $0x2d] sm:$0x1]
    %v55 = vld [vmem:[%s0 + $0x2e] sm:$0x1]
    %v56 = vld [vmem:[%s0 + $0x2f] sm:$0x1]
    %v57 = vld [vmem:[%s0 + $0x30] sm:$0x1]
    %v58 = vld [vmem:[%s0 + $0x31] sm:$0x1]
    %v59 = vld [vmem:[%s0 + $0x32] sm:$0x1]
    %v60 = vld [vmem:[%s0 + $0x33] sm:$0x1]
    %v61 = vld [vmem:[%s0 + $0x34] sm:$0x1]
    %v62 = vld [vmem:[%s0 + $0x35] sm:$0x1]
    %v63 = vld [vmem:[%s0 + $0x36] sm:$0x1]
    %v64 = vld [vmem:[%s0 + $0x37] sm:$0x1]
    %v65 = vld [vmem:[%s0 + $0x38] sm:$0x1]
    %v66 = vld [vmem:[%s0 + $0x39] sm:$0x1]
    %v67 = vld [vmem:[%s0 + $0x3a] sm:$0x1]
    %v68 = vld [vmem:[%s0 + $0x3b] sm:$0x1]
    %v69 = vld [vmem:[%s0 + $0x3c] sm:$0x1]
    %v70 = vld [vmem:[%s0 + $0x3d] sm:$0x1]
    %v71 = vld [vmem:[%s0 + $0x3e] sm:$0x1]
    %v72 = vld [vmem:[%s0 + $0x3f] sm:$0x1]
    %v73 = vld [vmem:[%s0 + $0x40] sm:$0x1]
    %v74 = vld [vmem:[%s0 + $0x41] sm:$0x1]
    %v75 = vld [vmem:[%s0 + $0x42] sm:$0x1]
    %v76 = vld [vmem:[%s0 + $0x43] sm:$0x1]
    %v77 = vld [vmem:[%s0 + $0x44] sm:$0x1]
    %v78 = vld [vmem:[%s0 + $0x45] sm:$0x1]
    %v79 = vld [vmem:[%s0 + $0x46] sm:$0x1]
    %v80 = vld [vmem:[%s0 + $0x47] sm:$0x1]
    %v81 = vld [vmem:[%s0 + $0x48] sm:$0x1]
    %v82 = vld [vmem:[%s0 + $0x49] sm:$0x1]
    %v83 = vld [vmem:[%s0 + $0x4a] sm:$0x1]
    %v84 = vld [vmem:[%s0 + $0x4b] sm:$0x1]
    %v85 = vld [vmem:[%s0 + $0x4c] sm:$0x1]
    %v86 = vld [vmem:[%s0 + $0x4d] sm:$0x1]
    %v87 = vld [vmem:[%s0 + $0x4e] sm:$0x1]
    %v88 = vld [vmem:[%s0 + $0x4f] sm:$0x1]
    %v89 = vld [vmem:[%s0 + $0x50] sm:$0x1]
    %v90 = vld [vmem:[%s0 + $0x51] sm:$0x1]
    %v91 = vld [vmem:[%s0 + $0x52] sm:$0x1]
    %v92 = vld [vmem:[%s0 + $0x53] sm:$0x1]
    %v93 = vld [vmem:[%s0 + $0x54] sm:$0x1]
    %v94 = vld [vmem:[%s0 + $0x55] sm:$0x1]
    %v95 = vld [vmem:[%s0 + $0x56] sm:$0x1]
    %v96 = vld [vmem:[%s0 + $0x57] sm:$0x1]
    %v97 = vld [vmem:[%s0 + $0x58] sm:$0x1]
    %v98 = vld [vmem:[%s0 + $0x59] sm:$0x1]
    %v99 = vld [vmem:[%s0 + $0x5a] sm:$0x1]
    %v100 = vld [vmem:[%s0 + $0x5b] sm:$0x1]
    %v101 = vld [vmem:[%s0 + $0x5c] sm:$0x1]
    %v102 = vld [vmem:[%s0 + $0x5d] sm:$0x1]
    %v103 = vld [vmem:[%s0 + $0x5e] sm:$0x1]
    %v104 = vld [vmem:[%s0 + $0x5f] sm:$0x1]
    %v105 = vld [vmem:[%s0 + $0x60] sm:$0x1]
    %v106 = vld [vmem:[%s0 + $0x61] sm:$0x1]
    %v107 = vld [vmem:[%s0 + $0x62] sm:$0x1]
    %v108 = vld [vmem:[%s0 + $0x63] sm:$0x1]
    %v109 = vld [vmem:[%s0 + $0x64] sm:$0x1]
    %v110 = vld [vmem:[%s0 + $0x65] sm:$0x1]
    %v111 = vld [vmem:[%s0 + $0x66] sm:$0x1]
    %v112 = vld [vmem:[%s0 + $0x67] sm:$0x1]
    %v113 = vld [vmem:[%s0 + $0x68] sm:$0x1]
    %v114 = vld [vmem:[%s0 + $0x69] sm:$0x1]
    %v115 = vld [vmem:[%s0 + $0x6a] sm:$0x1]
    %v116 = vld [vmem:[%s0 + $0x6b] sm:$0x1]
    %v117 = vld [vmem:[%s0 + $0x6c] sm:$0x1]
    %v118 = vld [vmem:[%s0 + $0x6d] sm:$0x1]
    %v119 = vld [vmem:[%s0 + $0x6e] sm:$0x1]
    %v120 = vld [vmem:[%s0 + $0x6f] sm:$0x1]
    %v121 = vld [vmem:[%s0 + $0x70] sm:$0x1]
    %v122 = vld [vmem:[%s0 + $0x71] sm:$0x1]
    %v123 = vld [vmem:[%s0 + $0x72] sm:$0x1]
    %v124 = vld [vmem:[%s0 + $0x73] sm:$0x1]
    %v125 = vld [vmem:[%s0 + $0x74] sm:$0x1]
    %v126 = vld [vmem:[%s0 + $0x75] sm:$0x1]
    %v127 = vld [vmem:[%s0 + $0x76] sm:$0x1]
    %v128 = vld [vmem:[%s0 + $0x77] sm:$0x1]
    %v129 = vld [vmem:[%s0 + $0x78] sm:$0x1]
    %v130 = vld [vmem:[%s0 + $0x79] sm:$0x1]
    %v131 = vld [vmem:[%s0 + $0x7a] sm:$0x1]
    %v132 = vld [vmem:[%s0 + $0x7b] sm:$0x1]
    %v133 = vld [vmem:[%s0 + $0x7c] sm:$0x1]
    %v134 = vld [vmem:[%s0 + $0x7d] sm:$0x1]
    %v135 = vld [vmem:[%s0 + $0x7e] sm:$0x1]
    %v136 = vld [vmem:[%s0 + $0x7f] sm:$0x1]
    %v137 = vld [vmem:[%s0 + $0x80] sm:$0x1]
    %v138 = vld [vmem:[%s0 + $0x81] sm:$0x1]
    %v139 = vld [vmem:[%s0 + $0x82] sm:$0x1]
    %v140 = vld [vmem:[%s0 + $0x83] sm:$0x1]
    %v141 = vld [vmem:[%s0 + $0x84] sm:$0x1]
    %v142 = vld [vmem:[%s0 + $0x85] sm:$0x1]
    %v143 = vld [vmem:[%s0 + $0x86] sm:$0x1]
    %v144 = vld [vmem:[%s0 + $0x87] sm:$0x1]
    %v145 = vld [vmem:[%s0 + $0x88] sm:$0x1]
    %v146 = vld [vmem:[%s0 + $0x89] sm:$0x1]
    %v147 = vld [vmem:[%s0 + $0x8a] sm:$0x1]
    %v148 = vld [vmem:[%s0 + $0x8b] sm:$0x1]
    %v149 = vld [vmem:[%s0 + $0x8c] sm:$0x1]
    %v150 = vld [vmem:[%s0 + $0x8d] sm:$0x1]
    %v151 = vld [vmem:[%s0 + $0x8e] sm:$0x1]
    %v152 = vld [vmem:[%s0 + $0x8f] sm:$0x1]
    %v153 = vld [vmem:[%s0 + $0x90] sm:$0x1]
    %v154 = vld [vmem:[%s0 + $0x91] sm:$0x1]
    %v155 = vld [vmem:[%s0 + $0x92] sm:$0x1]
    %v156 = vld [vmem:[%s0 + $0x93] sm:$0x1]
    %v157 = vld [vmem:[%s0 + $0x94] sm:$0x1]
    %v158 = vld [vmem:[%s0 + $0x95] sm:$0x1]
    %v159 = vld [vmem:[%s0 + $0x96] sm:$0x1]
    %v160 = vld [vmem:[%s0 + $0x97] sm:$0x1]
    %v161 = vld [vmem:[%s0 + $0x98] sm:$0x1]
    %v162 = vld [vmem:[%s0 + $0x99] sm:$0x1]
    %v163 = vld [vmem:[%s0 + $0x9a] sm:$0x1]
    %v164 = vld [vmem:[%s0 + $0x9b] sm:$0x1]
    %v165 = vld [vmem:[%s0 + $0x9c] sm:$0x1]
    %v166 = vld [vmem:[%s0 + $0x9d] sm:$0x1]
    %v167 = vld [vmem:[%s0 + $0x9e] sm:$0x1]
    %v168 = vld [vmem:[%s0 + $0x9f] sm:$0x1]
    %v169 = vld [vmem:[%s0 + $0xa0] sm:$0x1]
    %v170 = vld [vmem:[%s0 + $0xa1] sm:$0x1]
    %v171 = vld [vmem:[%s0 + $0xa2] sm:$0x1]
    %v172 = vld [vmem:[%s0 + $0xa3] sm:$0x1]
    %v173 = vld [vmem:[%s0 + $0xa4] sm:$0x1]
    %v174 = vld [vmem:[%s0 + $0xa5] sm:$0x1]
    %v175 = vld [vmem:[%s0 + $0xa6] sm:$0x1]
    %v176 = vld [vmem:[%s0 + $0xa7] sm:$0x1]
    %v177 = vld [vmem:[%s0 + $0xa8] sm:$0x1]
    %v178 = vld [vmem:[%s0 + $0xa9] sm:$0x1]
    %v179 = vld [vmem:[%s0 + $0xaa] sm:$0x1]
    %v180 = vld [vmem:[%s0 + $0xab] sm:$0x1]
    %v181 = vld [vmem:[%s0 + $0xac] sm:$0x1]
    %v182 = vld [vmem:[%s0 + $0xad] sm:$0x1]
    %v183 = vld [vmem:[%s0 + $0xae] sm:$0x1]
    %v184 = vld [vmem:[%s0 + $0xaf] sm:$0x1]
    %v185 = vld [vmem:[%s0 + $0xb0] sm:$0x1]
    %v186 = vld [vmem:[%s0 + $0xb1] sm:$0x1]
    %v187 = vld [vmem:[%s0 + $0xb2] sm:$0x1]
    %v188 = vld [vmem:[%s0 + $0xb3] sm:$0x1]
    %v189 = vld [vmem:[%s0 + $0xb4] sm:$0x1]
    %v190 = vld [vmem:[%s0 + $0xb5] sm:$0x1]
    %v191 = vld [vmem:[%s0 + $0xb6] sm:$0x1]
    %v192 = vld [vmem:[%s0 + $0xb7] sm:$0x1]
    %v193 = vld [vmem:[%s0 + $0xb8] sm:$0x1]
    %v194 = vld [vmem:[%s0 + $0xb9] sm:$0x1]
    %v195 = vld [vmem:[%s0 + $0xba] sm:$0x1]
    %v196 = vld [vmem:[%s0 + $0xbb] sm:$0x1]
    %v197 = vld [vmem:[%s0 + $0xbc] sm:$0x1]
    %v198 = vld [vmem:[%s0 + $0xbd] sm:$0x1]
    %v199 = vld [vmem:[%s0 + $0xbe] sm:$0x1]
    %v200 = vld [vmem:[%s0 + $0xbf] sm:$0x1]
    %v201 = vld [vmem:[%s0 + $0xc0] sm:$0x1]
    %v202 = vld [vmem:[%s0 + $0xc1] sm:$0x1]
    %v203 = vld [vmem:[%s0 + $0xc2] sm:$0x1]
    %v204 = vld [vmem:[%s0 + $0xc3] sm:$0x1]
    %v205 = vld [vmem:[%s0 + $0xc4] sm:$0x1]
    %v206 = vld [vmem:[%s0 + $0xc5] sm:$0x1]
    %v207 = vld [vmem:[%s0 + $0xc6] sm:$0x1]
    %v208 = vld [vmem:[%s0 + $0xc7] sm:$0x1]
    %v209 = vld [vmem:[%s0 + $0xc8] sm:$0x1]
    %v210 = vld [vmem:[%s0 + $0xc9] sm:$0x1]
    %v211 = vld [vmem:[%s0 + $0xca] sm:$0x1]
    %v212 = vld [vmem:[%s0 + $0xcb] sm:$0x1]
    %v213 = vld [vmem:[%s0 + $0xcc] sm:$0x1]
    %v214 = vld [vmem:[%s0 + $0xcd] sm:$0x1]
    %v215 = vld [vmem:[%s0 + $0xce] sm:$0x1]
    %v216 = vld [vmem:[%s0 + $0xcf] sm:$0x1]
    %v217 = vld [vmem:[%s0 + $0xd0] sm:$0x1]
    %v218 = vld [vmem:[%s0 + $0xd1] sm:$0x1]
    %v219 = vld [vmem:[%s0 + $0xd2] sm:$0x1]
    %v220 = vld [vmem:[%s0 + $0xd3] sm:$0x1]
    %v221 = vld [vmem:[%s0 + $0xd4] sm:$0x1]
    %v222 = vld [vmem:[%s0 + $0xd5] sm:$0x1]
    %v223 = vld [vmem:[%s0 + $0xd6] sm:$0x1]
    %v224 = vld [vmem:[%s0 + $0xd7] sm:$0x1]
    %v225 = vld [vmem:[%s0 + $0xd8] sm:$0x1]
    %v226 = vld [vmem:[%s0 + $0xd9] sm:$0x1]
    %v227 = vld [vmem:[%s0 + $0xda] sm:$0x1]
    %v228 = vld [vmem:[%s0 + $0xdb] sm:$0x1]
    %v229 = vld [vmem:[%s0 + $0xdc] sm:$0x1]
    %v230 = vld [vmem:[%s0 + $0xdd] sm:$0x1]
    %v231 = vld [vmem:[%s0 + $0xde] sm:$0x1]
    %v232 = vld [vmem:[%s0 + $0xdf] sm:$0x1]
    %v233 = vld [vmem:[%s0 + $0xe0] sm:$0x1]
    %v234 = vld [vmem:[%s0 + $0xe1] sm:$0x1]
    %v235 = vld [vmem:[%s0 + $0xe2] sm:$0x1]
    %v236 = vld [vmem:[%s0 + $0xe3] sm:$0x1]
    %v237 = vld [vmem:[%s0 + $0xe4] sm:$0x1]
    %v238 = vld [vmem:[%s0 + $0xe5] sm:$0x1]
    %v239 = vld [vmem:[%s0 + $0xe6] sm:$0x1]
    %v240 = vld [vmem:[%s0 + $0xe7] sm:$0x1]
    %v241 = vld [vmem:[%s0 + $0xe8] sm:$0x1]
    %v242 = vld [vmem:[%s0 + $0xe9] sm:$0x1]
    %v243 = vld [vmem:[%s0 + $0xea] sm:$0x1]
    %v244 = vld [vmem:[%s0 + $0xeb] sm:$0x1]
    %v245 = vld [vmem:[%s0 + $0xec] sm:$0x1]
    %v246 = vld [vmem:[%s0 + $0xed] sm:$0x1]
    %v247 = vld [vmem:[%s0 + $0xee] sm:$0x1]
    %v248 = vld [vmem:[%s0 + $0xef] sm:$0x1]
    %v249 = vld [vmem:[%s0 + $0xf0] sm:$0x1]
    %v250 = vld [vmem:[%s0 + $0xf1] sm:$0x1]
    %v251 = vld [vmem:[%s0 + $0xf2] sm:$0x1]
    %v252 = vld [vmem:[%s0 + $0xf3] sm:$0x1]
    %v253 = vld [vmem:[%s0 + $0xf4] sm:$0x1]
    %v254 = vld [vmem:[%s0 + $0xf5] sm:$0x1]
    %v255 = vld [vmem:[%s0 + $0xf6] sm:$0x1]
    %v256 = vld [vmem:[%s0 + $0xf7] sm:$0x1]
    %v257 = vld [vmem:[%s0 + $0xf8] sm:$0x1]
    %v258 = vld [vmem:[%s0 + $0xf9] sm:$0x1]
    %v259 = vld [vmem:[%s0 + $0xfa] sm:$0x1]
    %v260 = vld [vmem:[%s0 + $0xfb] sm:$0x1]
    %v261 = vld [vmem:[%s0 + $0xfc] sm:$0x1]
    %v262 = vld [vmem:[%s0 + $0xfd] sm:$0x1]
    %v263 = vld [vmem:[%s0 + $0xfe] sm:$0x1]
    %v264 = vld [vmem:[%s0 + $0xff] sm:$0x1]
    %v265 = vmax.f32 %v9, %v25
    %v266 = vmax.f32 %v10, %v26
    %v267 = vmax.f32 %v11, %v27
    %v268 = vmax.f32 %v12, %v28
    %v269 = vmax.f32 %v13, %v29
    %v270 = vmax.f32 %v14, %v30
    %v271 = vmax.f32 %v15, %v31
    %v272 = vmax.f32 %v16, %v32
    %v273 = vmax.f32 %v17, %v33
    %v274 = vmax.f32 %v18, %v34
    %v275 = vmax.f32 %v19, %v35
    %v276 = vmax.f32 %v20, %v36
    %v277 = vmax.f32 %v21, %v37
    %v278 = vmax.f32 %v22, %v38
    %v279 = vmax.f32 %v23, %v39
    %v280 = vmax.f32 %v24, %v40
    %v281 = vmax.f32 %v41, %v57
    %v282 = vmax.f32 %v42, %v58
    %v283 = vmax.f32 %v43, %v59
    %v284 = vmax.f32 %v44, %v60
    %v285 = vmax.f32 %v45, %v61
    %v286 = vmax.f32 %v46, %v62
    %v287 = vmax.f32 %v47, %v63
    %v288 = vmax.f32 %v48, %v64
    %v289 = vmax.f32 %v49, %v65
    %v290 = vmax.f32 %v50, %v66
    %v291 = vmax.f32 %v51, %v67
    %v292 = vmax.f32 %v52, %v68
    %v293 = vmax.f32 %v53, %v69
    %v294 = vmax.f32 %v54, %v70
    %v295 = vmax.f32 %v55, %v71
    %v296 = vmax.f32 %v56, %v72
    %v297 = vmax.f32 %v73, %v89
    %v298 = vmax.f32 %v74, %v90
    %v299 = vmax.f32 %v75, %v91
    %v300 = vmax.f32 %v76, %v92
    %v301 = vmax.f32 %v77, %v93
    %v302 = vmax.f32 %v78, %v94
    %v303 = vmax.f32 %v79, %v95
    %v304 = vmax.f32 %v80, %v96
    %v305 = vmax.f32 %v81, %v97
    %v306 = vmax.f32 %v82, %v98
    %v307 = vmax.f32 %v83, %v99
    %v308 = vmax.f32 %v84, %v100
    %v309 = vmax.f32 %v85, %v101
    %v310 = vmax.f32 %v86, %v102
    %v311 = vmax.f32 %v87, %v103
    %v312 = vmax.f32 %v88, %v104
    %v313 = vmax.f32 %v105, %v121
    %v314 = vmax.f32 %v106, %v122
    %v315 = vmax.f32 %v107, %v123
    %v316 = vmax.f32 %v108, %v124
    %v317 = vmax.f32 %v109, %v125
    %v318 = vmax.f32 %v110, %v126
    %v319 = vmax.f32 %v111, %v127
    %v320 = vmax.f32 %v112, %v128
    %v321 = vmax.f32 %v113, %v129
    %v322 = vmax.f32 %v114, %v130
    %v323 = vmax.f32 %v115, %v131
    %v324 = vmax.f32 %v116, %v132
    %v325 = vmax.f32 %v117, %v133
    %v326 = vmax.f32 %v118, %v134
    %v327 = vmax.f32 %v119, %v135
    %v328 = vmax.f32 %v120, %v136
    %v329 = vmax.f32 %v137, %v153
    %v330 = vmax.f32 %v138, %v154
    %v331 = vmax.f32 %v139, %v155
    %v332 = vmax.f32 %v140, %v156
    %v333 = vmax.f32 %v141, %v157
    %v334 = vmax.f32 %v142, %v158
    %v335 = vmax.f32 %v143, %v159
    %v336 = vmax.f32 %v144, %v160
    %v337 = vmax.f32 %v145, %v161
    %v338 = vmax.f32 %v146, %v162
    %v339 = vmax.f32 %v147, %v163
    %v340 = vmax.f32 %v148, %v164
    %v341 = vmax.f32 %v149, %v165
    %v342 = vmax.f32 %v150, %v166
    %v343 = vmax.f32 %v151, %v167
    %v344 = vmax.f32 %v152, %v168
    %v345 = vmax.f32 %v169, %v185
    %v346 = vmax.f32 %v170, %v186
    %v347 = vmax.f32 %v171, %v187
    %v348 = vmax.f32 %v172, %v188
    %v349 = vmax.f32 %v173, %v189
    %v350 = vmax.f32 %v174, %v190
    %v351 = vmax.f32 %v175, %v191
    %v352 = vmax.f32 %v176, %v192
    %v353 = vmax.f32 %v177, %v193
    %v354 = vmax.f32 %v178, %v194
    %v355 = vmax.f32 %v179, %v195
    %v356 = vmax.f32 %v180, %v196
    %v357 = vmax.f32 %v181, %v197
    %v358 = vmax.f32 %v182, %v198
    %v359 = vmax.f32 %v183, %v199
    %v360 = vmax.f32 %v184, %v200
    %v361 = vmax.f32 %v201, %v217
    %v362 = vmax.f32 %v202, %v218
    %v363 = vmax.f32 %v203, %v219
    %v364 = vmax.f32 %v204, %v220
    %v365 = vmax.f32 %v205, %v221
    %v366 = vmax.f32 %v206, %v222
    %v367 = vmax.f32 %v207, %v223
    %v368 = vmax.f32 %v208, %v224
    %v369 = vmax.f32 %v209, %v225
    %v370 = vmax.f32 %v210, %v226
    %v371 = vmax.f32 %v211, %v227
    %v372 = vmax.f32 %v212, %v228
    %v373 = vmax.f32 %v213, %v229
    %v374 = vmax.f32 %v214, %v230
    %v375 = vmax.f32 %v215, %v231
    %v376 = vmax.f32 %v216, %v232
    %v377 = vmax.f32 %v233, %v249
    %v378 = vmax.f32 %v234, %v250
    %v379 = vmax.f32 %v235, %v251
    %v380 = vmax.f32 %v236, %v252
    %v381 = vmax.f32 %v237, %v253
    %v382 = vmax.f32 %v238, %v254
    %v383 = vmax.f32 %v239, %v255
    %v384 = vmax.f32 %v240, %v256
    %v385 = vmax.f32 %v241, %v257
    %v386 = vmax.f32 %v242, %v258
    %v387 = vmax.f32 %v243, %v259
    %v388 = vmax.f32 %v244, %v260
    %v389 = vmax.f32 %v245, %v261
    %v390 = vmax.f32 %v246, %v262
    %v391 = vmax.f32 %v247, %v263
    %v392 = vmax.f32 %v248, %v264
    %v393 = vmax.f32 %v265, %v41
    %v394 = vmax.f32 %v266, %v42
    %v395 = vmax.f32 %v267, %v43
    %v396 = vmax.f32 %v268, %v44
    %v397 = vmax.f32 %v269, %v45
    %v398 = vmax.f32 %v270, %v46
    %v399 = vmax.f32 %v271, %v47
    %v400 = vmax.f32 %v272, %v48
    %v401 = vmax.f32 %v273, %v49
    %v402 = vmax.f32 %v274, %v50
    %v403 = vmax.f32 %v275, %v51
    %v404 = vmax.f32 %v276, %v52
    %v405 = vmax.f32 %v277, %v53
    %v406 = vmax.f32 %v278, %v54
    %v407 = vmax.f32 %v279, %v55
    %v408 = vmax.f32 %v280, %v56
    %v409 = vmax.f32 %v281, %v73
    %v410 = vmax.f32 %v282, %v74
    %v411 = vmax.f32 %v283, %v75
    %v412 = vmax.f32 %v284, %v76
    %v413 = vmax.f32 %v285, %v77
    %v414 = vmax.f32 %v286, %v78
    %v415 = vmax.f32 %v287, %v79
    %v416 = vmax.f32 %v288, %v80
    %v417 = vmax.f32 %v289, %v81
    %v418 = vmax.f32 %v290, %v82
    %v419 = vmax.f32 %v291, %v83
    %v420 = vmax.f32 %v292, %v84
    %v421 = vmax.f32 %v293, %v85
    %v422 = vmax.f32 %v294, %v86
    %v423 = vmax.f32 %v295, %v87
    %v424 = vmax.f32 %v296, %v88
    %v425 = vmax.f32 %v297, %v105
    %v426 = vmax.f32 %v298, %v106
    %v427 = vmax.f32 %v299, %v107
    %v428 = vmax.f32 %v300, %v108
    %v429 = vmax.f32 %v301, %v109
    %v430 = vmax.f32 %v302, %v110
    %v431 = vmax.f32 %v303, %v111
    %v432 = vmax.f32 %v304, %v112
    %v433 = vmax.f32 %v305, %v113
    %v434 = vmax.f32 %v306, %v114
    %v435 = vmax.f32 %v307, %v115
    %v436 = vmax.f32 %v308, %v116
    %v437 = vmax.f32 %v309, %v117
    %v438 = vmax.f32 %v310, %v118
    %v439 = vmax.f32 %v311, %v119
    %v440 = vmax.f32 %v312, %v120
    %v441 = vmax.f32 %v313, %v137
    %v442 = vmax.f32 %v314, %v138
    %v443 = vmax.f32 %v315, %v139
    %v444 = vmax.f32 %v316, %v140
    %v445 = vmax.f32 %v317, %v141
    %v446 = vmax.f32 %v318, %v142
    %v447 = vmax.f32 %v319, %v143
    %v448 = vmax.f32 %v320, %v144
    %v449 = vmax.f32 %v321, %v145
    %v450 = vmax.f32 %v322, %v146
    %v451 = vmax.f32 %v323, %v147
    %v452 = vmax.f32 %v324, %v148
    %v453 = vmax.f32 %v325, %v149
    %v454 = vmax.f32 %v326, %v150
    %v455 = vmax.f32 %v327, %v151
    %v456 = vmax.f32 %v328, %v152
    %v457 = vmax.f32 %v329, %v169
    %v458 = vmax.f32 %v330, %v170
    %v459 = vmax.f32 %v331, %v171
    %v460 = vmax.f32 %v332, %v172
    %v461 = vmax.f32 %v333, %v173
    %v462 = vmax.f32 %v334, %v174
    %v463 = vmax.f32 %v335, %v175
    %v464 = vmax.f32 %v336, %v176
    %v465 = vmax.f32 %v337, %v177
    %v466 = vmax.f32 %v338, %v178
    %v467 = vmax.f32 %v339, %v179
    %v468 = vmax.f32 %v340, %v180
    %v469 = vmax.f32 %v341, %v181
    %v470 = vmax.f32 %v342, %v182
    %v471 = vmax.f32 %v343, %v183
    %v472 = vmax.f32 %v344, %v184
    %v473 = vmax.f32 %v345, %v201
    %v474 = vmax.f32 %v346, %v202
    %v475 = vmax.f32 %v347, %v203
    %v476 = vmax.f32 %v348, %v204
    %v477 = vmax.f32 %v349, %v205
    %v478 = vmax.f32 %v350, %v206
    %v479 = vmax.f32 %v351, %v207
    %v480 = vmax.f32 %v352, %v208
    %v481 = vmax.f32 %v353, %v209
    %v482 = vmax.f32 %v354, %v210
    %v483 = vmax.f32 %v355, %v211
    %v484 = vmax.f32 %v356, %v212
    %v485 = vmax.f32 %v357, %v213
    %v486 = vmax.f32 %v358, %v214
    %v487 = vmax.f32 %v359, %v215
    %v488 = vmax.f32 %v360, %v216
    %v489 = vmax.f32 %v361, %v233
    %v490 = vmax.f32 %v362, %v234
    %v491 = vmax.f32 %v363, %v235
    %v492 = vmax.f32 %v364, %v236
    %v493 = vmax.f32 %v365, %v237
    %v494 = vmax.f32 %v366, %v238
    %v495 = vmax.f32 %v367, %v239
    %v496 = vmax.f32 %v368, %v240
    %v497 = vmax.f32 %v369, %v241
    %v498 = vmax.f32 %v370, %v242
    %v499 = vmax.f32 %v371, %v243
    %v500 = vmax.f32 %v372, %v244
    %v501 = vmax.f32 %v373, %v245
    %v502 = vmax.f32 %v374, %v246
    %v503 = vmax.f32 %v375, %v247
    %v504 = vmax.f32 %v376, %v248
    %v505 = vmax.f32 %v377, %v233
    %v506 = vmax.f32 %v378, %v234
    %v507 = vmax.f32 %v379, %v235
    %v508 = vmax.f32 %v380, %v236
    %v509 = vmax.f32 %v381, %v237
    %v510 = vmax.f32 %v382, %v238
    %v511 = vmax.f32 %v383, %v239
    %v512 = vmax.f32 %v384, %v240
    %v513 = vmax.f32 %v385, %v241
    %v514 = vmax.f32 %v386, %v242
    %v515 = vmax.f32 %v387, %v243
    %v516 = vmax.f32 %v388, %v244
    %v517 = vmax.f32 %v389, %v245
    %v518 = vmax.f32 %v390, %v246
    %v519 = vmax.f32 %v391, %v247
    %v520 = vmax.f32 %v392, %v248
    %v521 = vmax.f32 %v393, %v394
    %v522 = vmax.f32 %v395, %v396
    %v523 = vmax.f32 %v397, %v398
    %v524 = vmax.f32 %v399, %v400
    %v525 = vmax.f32 %v401, %v402
    %v526 = vmax.f32 %v403, %v404
    %v527 = vmax.f32 %v405, %v406
    %v528 = vmax.f32 %v407, %v408
    %v529 = vmax.f32 %v409, %v410
    %v530 = vmax.f32 %v411, %v412
    %v531 = vmax.f32 %v413, %v414
    %v532 = vmax.f32 %v415, %v416
    %v533 = vmax.f32 %v417, %v418
    %v534 = vmax.f32 %v419, %v420
    %v535 = vmax.f32 %v421, %v422
    %v536 = vmax.f32 %v423, %v424
    %v537 = vmax.f32 %v425, %v426
    %v538 = vmax.f32 %v427, %v428
    %v539 = vmax.f32 %v429, %v430
    %v540 = vmax.f32 %v431, %v432
    %v541 = vmax.f32 %v433, %v434
    %v542 = vmax.f32 %v435, %v436
    %v543 = vmax.f32 %v437, %v438
    %v544 = vmax.f32 %v439, %v440
    %v545 = vmax.f32 %v441, %v442
    %v546 = vmax.f32 %v443, %v444
    %v547 = vmax.f32 %v445, %v446
    %v548 = vmax.f32 %v447, %v448
    %v549 = vmax.f32 %v449, %v450
    %v550 = vmax.f32 %v451, %v452
    %v551 = vmax.f32 %v453, %v454
    %v552 = vmax.f32 %v455, %v456
    %v553 = vmax.f32 %v457, %v458
    %v554 = vmax.f32 %v459, %v460
    %v555 = vmax.f32 %v461, %v462
    %v556 = vmax.f32 %v463, %v464
    %v557 = vmax.f32 %v465, %v466
    %v558 = vmax.f32 %v467, %v468
    %v559 = vmax.f32 %v469, %v470
    %v560 = vmax.f32 %v471, %v472
    %v561 = vmax.f32 %v473, %v474
    %v562 = vmax.f32 %v475, %v476
    %v563 = vmax.f32 %v477, %v478
    %v564 = vmax.f32 %v479, %v480
    %v565 = vmax.f32 %v481, %v482
    %v566 = vmax.f32 %v483, %v484
    %v567 = vmax.f32 %v485, %v486
    %v568 = vmax.f32 %v487, %v488
    %v569 = vmax.f32 %v489, %v490
    %v570 = vmax.f32 %v491, %v492
    %v571 = vmax.f32 %v493, %v494
    %v572 = vmax.f32 %v495, %v496
    %v573 = vmax.f32 %v497, %v498
    %v574 = vmax.f32 %v499, %v500
    %v575 = vmax.f32 %v501, %v502
    %v576 = vmax.f32 %v503, %v504
    %v577 = vmax.f32 %v505, %v506
    %v578 = vmax.f32 %v507, %v508
    %v579 = vmax.f32 %v509, %v510
    %v580 = vmax.f32 %v511, %v512
    %v581 = vmax.f32 %v513, %v514
    %v582 = vmax.f32 %v515, %v516
    %v583 = vmax.f32 %v517, %v518
    %v584 = vmax.f32 %v519, %v520
    %v585 = vmax.f32 %v521, %v395
    %v586 = vmax.f32 %v522, %v397
    %v587 = vmax.f32 %v523, %v399
    %v588 = vmax.f32 %v524, %v401
    %v589 = vmax.f32 %v525, %v403
    %v590 = vmax.f32 %v526, %v405
    %v591 = vmax.f32 %v527, %v407
    %v592 = vmax.f32 %v528, %v407
    %v593 = vmax.f32 %v529, %v411
    %v594 = vmax.f32 %v530, %v413
    %v595 = vmax.f32 %v531, %v415
    %v596 = vmax.f32 %v532, %v417
    %v597 = vmax.f32 %v533, %v419
    %v598 = vmax.f32 %v534, %v421
    %v599 = vmax.f32 %v535, %v423
    %v600 = vmax.f32 %v536, %v423
    %v601 = vmax.f32 %v537, %v427
    %v602 = vmax.f32 %v538, %v429
    %v603 = vmax.f32 %v539, %v431
    %v604 = vmax.f32 %v540, %v433
    %v605 = vmax.f32 %v541, %v435
    %v606 = vmax.f32 %v542, %v437
    %v607 = vmax.f32 %v543, %v439
    %v608 = vmax.f32 %v544, %v439
    %v609 = vmax.f32 %v545, %v443
    %v610 = vmax.f32 %v546, %v445
    %v611 = vmax.f32 %v547, %v447
    %v612 = vmax.f32 %v548, %v449
    %v613 = vmax.f32 %v549, %v451
    %v614 = vmax.f32 %v550, %v453
    %v615 = vmax.f32 %v551, %v455
    %v616 = vmax.f32 %v552, %v455
    %v617 = vmax.f32 %v553, %v459
    %v618 = vmax.f32 %v554, %v461
    %v619 = vmax.f32 %v555, %v463
    %v620 = vmax.f32 %v556, %v465
    %v621 = vmax.f32 %v557, %v467
    %v622 = vmax.f32 %v558, %v469
    %v623 = vmax.f32 %v559, %v471
    %v624 = vmax.f32 %v560, %v471
    %v625 = vmax.f32 %v561, %v475
    %v626 = vmax.f32 %v562, %v477
    %v627 = vmax.f32 %v563, %v479
    %v628 = vmax.f32 %v564, %v481
    %v629 = vmax.f32 %v565, %v483
    %v630 = vmax.f32 %v566, %v485
    %v631 = vmax.f32 %v567, %v487
    %v632 = vmax.f32 %v568, %v487
    %v633 = vmax.f32 %v569, %v491
    %v634 = vmax.f32 %v570, %v493
    %v635 = vmax.f32 %v571, %v495
    %v636 = vmax.f32 %v572, %v497
    %v637 = vmax.f32 %v573, %v499
    %v638 = vmax.f32 %v574, %v501
    %v639 = vmax.f32 %v575, %v503
    %v640 = vmax.f32 %v576, %v503
    %v641 = vmax.f32 %v577, %v507
    %v642 = vmax.f32 %v578, %v509
    %v643 = vmax.f32 %v579, %v511
    %v644 = vmax.f32 %v580, %v513
    %v645 = vmax.f32 %v581, %v515
    %v646 = vmax.f32 %v582, %v517
    %v647 = vmax.f32 %v583, %v519
    %v648 = vmax.f32 %v584, %v519
    %vm649 = vcmask 57344
    %650 = vst.msk [vmem:[#allocation2] sm:$0x1] %vm649, %v585
    %651 = vst.msk [vmem:[#allocation2 + $0x1] sm:$0x1] %vm649, %v586
    %652 = vst.msk [vmem:[#allocation2 + $0x2] sm:$0x1] %vm649, %v587
    %653 = vst.msk [vmem:[#allocation2 + $0x3] sm:$0x1] %vm649, %v588
    %654 = vst.msk [vmem:[#allocation2 + $0x4] sm:$0x1] %vm649, %v589
    %655 = vst.msk [vmem:[#allocation2 + $0x5] sm:$0x1] %vm649, %v590
    %656 = vst.msk [vmem:[#allocation2 + $0x6] sm:$0x1] %vm649, %v591
    %657 = vst.msk [vmem:[#allocation2 + $0x7] sm:$0x1] %vm649, %v592
    %658 = vst.msk [vmem:[#allocation2 + $0x8] sm:$0x1] %vm649, %v593
    %659 = vst.msk [vmem:[#allocation2 + $0x9] sm:$0x1] %vm649, %v594
    %660 = vst.msk [vmem:[#allocation2 + $0xa] sm:$0x1] %vm649, %v595
    %661 = vst.msk [vmem:[#allocation2 + $0xb] sm:$0x1] %vm649, %v596
    %662 = vst.msk [vmem:[#allocation2 + $0xc] sm:$0x1] %vm649, %v597
    %663 = vst.msk [vmem:[#allocation2 + $0xd] sm:$0x1] %vm649, %v598
    %664 = vst.msk [vmem:[#allocation2 + $0xe] sm:$0x1] %vm649, %v599
    %665 = vst.msk [vmem:[#allocation2 + $0xf] sm:$0x1] %vm649, %v600
    %666 = vst.msk [vmem:[#allocation2 + $0x10] sm:$0x1] %vm649, %v601
    %667 = vst.msk [vmem:[#allocation2 + $0x11] sm:$0x1] %vm649, %v602
    %668 = vst.msk [vmem:[#allocation2 + $0x12] sm:$0x1] %vm649, %v603
    %669 = vst.msk [vmem:[#allocation2 + $0x13] sm:$0x1] %vm649, %v604
    %670 = vst.msk [vmem:[#allocation2 + $0x14] sm:$0x1] %vm649, %v605
    %671 = vst.msk [vmem:[#allocation2 + $0x15] sm:$0x1] %vm649, %v606
    %672 = vst.msk [vmem:[#allocation2 + $0x16] sm:$0x1] %vm649, %v607
    %673 = vst.msk [vmem:[#allocation2 + $0x17] sm:$0x1] %vm649, %v608
    %674 = vst.msk [vmem:[#allocation2 + $0x18] sm:$0x1] %vm649, %v609
    %675 = vst.msk [vmem:[#allocation2 + $0x19] sm:$0x1] %vm649, %v610
    %676 = vst.msk [vmem:[#allocation2 + $0x1a] sm:$0x1] %vm649, %v611
    %677 = vst.msk [vmem:[#allocation2 + $0x1b] sm:$0x1] %vm649, %v612
    %678 = vst.msk [vmem:[#allocation2 + $0x1c] sm:$0x1] %vm649, %v613
    %679 = vst.msk [vmem:[#allocation2 + $0x1d] sm:$0x1] %vm649, %v614
    %680 = vst.msk [vmem:[#allocation2 + $0x1e] sm:$0x1] %vm649, %v615
    %681 = vst.msk [vmem:[#allocation2 + $0x1f] sm:$0x1] %vm649, %v616
    %682 = vst.msk [vmem:[#allocation2 + $0x20] sm:$0x1] %vm649, %v617
    %683 = vst.msk [vmem:[#allocation2 + $0x21] sm:$0x1] %vm649, %v618
    %684 = vst.msk [vmem:[#allocation2 + $0x22] sm:$0x1] %vm649, %v619
    %685 = vst.msk [vmem:[#allocation2 + $0x23] sm:$0x1] %vm649, %v620
    %686 = vst.msk [vmem:[#allocation2 + $0x24] sm:$0x1] %vm649, %v621
    %687 = vst.msk [vmem:[#allocation2 + $0x25] sm:$0x1] %vm649, %v622
    %688 = vst.msk [vmem:[#allocation2 + $0x26] sm:$0x1] %vm649, %v623
    %689 = vst.msk [vmem:[#allocation2 + $0x27] sm:$0x1] %vm649, %v624
    %690 = vst.msk [vmem:[#allocation2 + $0x28] sm:$0x1] %vm649, %v625
    %691 = vst.msk [vmem:[#allocation2 + $0x29] sm:$0x1] %vm649, %v626
    %692 = vst.msk [vmem:[#allocation2 + $0x2a] sm:$0x1] %vm649, %v627
    %693 = vst.msk [vmem:[#allocation2 + $0x2b] sm:$0x1] %vm649, %v628
    %694 = vst.msk [vmem:[#allocation2 + $0x2c] sm:$0x1] %vm649, %v629
    %695 = vst.msk [vmem:[#allocation2 + $0x2d] sm:$0x1] %vm649, %v630
    %696 = vst.msk [vmem:[#allocation2 + $0x2e] sm:$0x1] %vm649, %v631
    %697 = vst.msk [vmem:[#allocation2 + $0x2f] sm:$0x1] %vm649, %v632
    %698 = vst.msk [vmem:[#allocation2 + $0x30] sm:$0x1] %vm649, %v633
    %699 = vst.msk [vmem:[#allocation2 + $0x31] sm:$0x1] %vm649, %v634
    %700 = vst.msk [vmem:[#allocation2 + $0x32] sm:$0x1] %vm649, %v635
    %701 = vst.msk [vmem:[#allocation2 + $0x33] sm:$0x1] %vm649, %v636
    %702 = vst.msk [vmem:[#allocation2 + $0x34] sm:$0x1] %vm649, %v637
    %703 = vst.msk [vmem:[#allocation2 + $0x35] sm:$0x1] %vm649, %v638
    %704 = vst.msk [vmem:[#allocation2 + $0x36] sm:$0x1] %vm649, %v639
    %705 = vst.msk [vmem:[#allocation2 + $0x37] sm:$0x1] %vm649, %v640
    %706 = vst.msk [vmem:[#allocation2 + $0x38] sm:$0x1] %vm649, %v641
    %707 = vst.msk [vmem:[#allocation2 + $0x39] sm:$0x1] %vm649, %v642
    %708 = vst.msk [vmem:[#allocation2 + $0x3a] sm:$0x1] %vm649, %v643
    %709 = vst.msk [vmem:[#allocation2 + $0x3b] sm:$0x1] %vm649, %v644
    %710 = vst.msk [vmem:[#allocation2 + $0x3c] sm:$0x1] %vm649, %v645
    %711 = vst.msk [vmem:[#allocation2 + $0x3d] sm:$0x1] %vm649, %v646
    %712 = vst.msk [vmem:[#allocation2 + $0x3e] sm:$0x1] %vm649, %v647
    %713 = vst.msk [vmem:[#allocation2 + $0x3f] sm:$0x1] %vm649, %v648
    // Predicated region
    $region6: #{tpu_custom_call.1} parent=1 // pred_check
      _
    $region7: #{tpu_custom_call.1} parent=1 // pred_check_branch
      %715 = sbr.rel (0) target = $region9
    $region8: #{tpu_custom_call.1} parent=1 // pred_region
      %s717 = ssub.s32 1024, 1024
      %718 = vsyncadd [#allocation3], %s717
      %s719 = sshll.u32 [#allocation2], 4
      %s720 = int_to_ptr.vmem [resolvable:$true] %s719
      %725 = dma.vmem_to_hbm [thread:$0]  %s720, 1024, %s1, [#allocation3], 16, 16, 1
    $region9: #{tpu_custom_call.1} parent=1 // pred_fallthru
      _
    // Predicated region
    $region10: #{tpu_custom_call.1} parent=1 // pred_check
      _
    $region11: #{tpu_custom_call.1} parent=1 // pred_check_branch
      %727 = sbr.rel (0) target = $region13
    $region12: #{tpu_custom_call.1} parent=1 // pred_region
      %728 = dma.done [#allocation3], 1024
    $region13: #{tpu_custom_call.1} parent=1 // pred_fallthru
      _
    %729 = vsyncpa [#allocation3], 1

</llo_original>
